<compile_context>
chip_gen: v7x
topology: tpu7x:2x2x1
jax: 0.10.0
libtpu: 0.0.40
codegen_flags: <defaults>
</compile_context>

<pallas_src>
import jax
import jax.numpy as jnp
import numpy as np
from jax.experimental import pallas as pl
from jax.experimental.pallas import tpu as pltpu

# Problem sizes (small, consistent with the module).
N = 16        # num_nodes (multiple of 8 -> sublane aligned)
F_IN = 32     # in_channels
F_OUT = 32    # out_channels
R = 3         # num_relations
E = 48        # num_edges (synthetic)

F_PAD = 128   # out_channels padded to one full lane group -> lane-dense stores

assert F_OUT <= F_PAD and F_PAD == 128, "kernel slicing assumes F_OUT <= 128 == F_PAD"
assert N % 8 == 0, "scratch row blocks must be sublane aligned"


def _rgcn_kernel(x_ref, w_ref, bias_ref, afull_ref, out_ref, h_scr):
    """Single-invocation fused RGCN forward.

    x_ref     : [N, F_IN]              bf16
    w_ref     : [F_IN, (R+1)*F_PAD]    bf16  ([W_1|...|W_R|W_root], each block padded to F_PAD lanes)
    bias_ref  : [1, F_PAD]             f32   (zero-padded)
    afull_ref : [N, (R+1)*N]           bf16  ([A_1 | ... | A_R | I_N], mean-normalized, dst x src)
    out_ref   : [N, F_PAD]             f32
    h_scr     : [(R+1)*N, F_PAD]       bf16  VMEM scratch
    """
    # MXU push #1: project x through all relation weights AND the root weight.
    hw = jnp.dot(x_ref[...], w_ref[...],
                 preferred_element_type=jnp.float32)         # [N, (R+1)*F_PAD] f32
    hw_bf = hw.astype(jnp.bfloat16)

    # Restack the (R+1) 128-lane blocks into row blocks of the scratch.
    # Static slices: lane-group-aligned reads, bf16 (16,128)-tile-aligned stores.
    for r in range(R + 1):
        h_scr[r * N:(r + 1) * N, :] = hw_bf[:, r * F_PAD:(r + 1) * F_PAD]

    # MXU push #2: one [N,(R+1)*N] @ [(R+1)*N,F_PAD] contraction does all
    # relation aggregations + the root (identity block) sum in one go.
    out_ref[...] = jnp.dot(afull_ref[...], h_scr[...],
                           preferred_element_type=jnp.float32) + bias_ref[...]


def pack_rgcn_params(weight, root, bias):
    """Pack parameters once per parameter update (hoisted out of the hot path).

    weight:[R,F_IN,F_OUT] f32, root:[F_IN,F_OUT] f32, bias:[F_OUT] f32
    returns (w_cat_bf16 [F_IN,(R+1)*F_PAD], bias_pad_f32 [1,F_PAD]).
    """
    w_cat = jnp.zeros((F_IN, (R + 1) * F_PAD), jnp.float32)
    for r in range(R):
        w_cat = w_cat.at[:, r * F_PAD:r * F_PAD + F_OUT].set(weight[r])
    w_cat = w_cat.at[:, R * F_PAD:R * F_PAD + F_OUT].set(root)
    bias_pad = jnp.zeros((1, F_PAD), jnp.float32).at[0, :F_OUT].set(bias)
    return w_cat.astype(jnp.bfloat16), bias_pad


def build_adjacency(edge_src, edge_dst, edge_type):
    """Glue, once per graph: edge lists -> [A_1|...|A_R|I_N] bf16, [N,(R+1)*N].

    Multiplicity-aware (duplicate edges counted) and mean-normalized by total
    in-degree per relation; zero-in-degree rows stay 0 (matches PyG 'mean').
    """
    adj = np.zeros((R, N, N), np.float32)
    np.add.at(adj, (edge_type, edge_dst, edge_src), 1.0)
    deg = adj.sum(axis=2, keepdims=True)
    a_norm = adj / np.maximum(deg, 1.0)
    a_full = np.concatenate(list(a_norm) + [np.eye(N, dtype=np.float32)], axis=1)
    return jnp.asarray(a_full).astype(jnp.bfloat16)


@jax.jit
def rgcn_forward(x, w_bf, bias_pad, a_full_bf):
    """x:[N,F_IN] f32 -> out:[N,F_OUT] f32."""
    x_bf = x.astype(jnp.bfloat16)
    out_pad = pl.pallas_call(
        _rgcn_kernel,
        out_shape=jax.ShapeDtypeStruct((N, F_PAD), jnp.float32),
        in_specs=[
            pl.BlockSpec(memory_space=pltpu.MemorySpace.VMEM),   # x
            pl.BlockSpec(memory_space=pltpu.MemorySpace.VMEM),   # W_cat
            pl.BlockSpec(memory_space=pltpu.MemorySpace.VMEM),   # bias
            pl.BlockSpec(memory_space=pltpu.MemorySpace.VMEM),   # A_full
        ],
        out_specs=pl.BlockSpec(memory_space=pltpu.MemorySpace.VMEM),
        scratch_shapes=[pltpu.VMEM(((R + 1) * N, F_PAD), jnp.bfloat16)],
    )(x_bf, w_bf, bias_pad, a_full_bf)
    return out_pad[:, :F_OUT]


def rgcn_reference(x, w_bf, bias_pad, a_full_bf):
    """NumPy reference mirroring the kernel's bf16 quantization points."""
    xb = np.asarray(x.astype(jnp.bfloat16).astype(jnp.float32))
    wb = np.asarray(jnp.asarray(w_bf).astype(jnp.float32))
    hw = xb @ wb                                                   # f32 accumulate
    hw_bf = np.asarray(jnp.asarray(hw).astype(jnp.bfloat16).astype(jnp.float32))
    h_stack = np.concatenate(
        [hw_bf[:, r * F_PAD:(r + 1) * F_PAD] for r in range(R + 1)], axis=0)
    a = np.asarray(jnp.asarray(a_full_bf).astype(jnp.float32))
    out = a @ h_stack + np.asarray(bias_pad)
    return out[:, :F_OUT]


if __name__ == "__main__":
    key = jax.random.PRNGKey(0)
    kx, kw, kr, kb, ks, kd, kt = jax.random.split(key, 7)

    # Node features + RGCNConv parameters (deterministic synthetic values).
    x = jax.random.normal(kx, (N, F_IN), jnp.float32)
    weight = jax.random.normal(kw, (R, F_IN, F_OUT), jnp.float32) * 0.1
    root = jax.random.normal(kr, (F_IN, F_OUT), jnp.float32) * 0.1
    bias = jax.random.normal(kb, (F_OUT,), jnp.float32) * 0.1

    # Module inputs: edge_index [2, E], edge_type [E].
    src = np.asarray(jax.random.randint(ks, (E,), 0, N))
    dst = np.asarray(jax.random.randint(kd, (E,), 0, N))
    edge_type = np.asarray(jax.random.randint(kt, (E,), 0, R))

    # One-time packing (hoisted out of the per-call path).
    w_bf, bias_pad = pack_rgcn_params(weight, root, bias)   # per parameter update
    a_full_bf = build_adjacency(src, dst, edge_type)        # per graph

    out = jax.block_until_ready(rgcn_forward(x, w_bf, bias_pad, a_full_bf))

    ref = rgcn_reference(x, w_bf, bias_pad, a_full_bf)
    np.testing.assert_allclose(np.asarray(out), ref, rtol=2e-3, atol=2e-3)

    print("KERNEL_OK")
</pallas_src>

<mosaic_0001>
module attributes {stable_mosaic.version = 11 : i64} {
  func.func @_rgcn_kernel(%arg0: memref<16x32xbf16, #tpu.memory_space<vmem>>, %arg1: memref<32x512xbf16, #tpu.memory_space<vmem>>, %arg2: memref<1x128xf32, #tpu.memory_space<vmem>>, %arg3: memref<16x64xbf16, #tpu.memory_space<vmem>>, %arg4: memref<16x128xf32, #tpu.memory_space<vmem>>, %arg5: memref<64x128xbf16, #tpu.memory_space<vmem>>) attributes {dimension_semantics = [], scalar_prefetch = 0 : i64, scratch_operands = 1 : i64, tpu.core_type = #tpu.core_type<tc>} {
    %c0 = arith.constant 0 : index
    %c0_0 = arith.constant 0 : index
    %0 = vector.load %arg0[%c0, %c0_0] : memref<16x32xbf16, #tpu.memory_space<vmem>>, vector<16x32xbf16>
    %c0_1 = arith.constant 0 : index
    %c0_2 = arith.constant 0 : index
    %1 = vector.load %arg1[%c0_1, %c0_2] : memref<32x512xbf16, #tpu.memory_space<vmem>>, vector<32x512xbf16>
    %cst = arith.constant dense<0.000000e+00> : vector<16x512xf32>
    %2 = tpu.matmul %0, %1, %cst {dimension_numbers = #tpu.dot_dimension_numbers<[1], [0], [0], [1], [0, 0, 1, 1], [], []>} : vector<16x32xbf16>, vector<32x512xbf16>, vector<16x512xf32> -> vector<16x512xf32>
    %3 = arith.truncf %2 : vector<16x512xf32> to vector<16x512xbf16>
    %4 = vector.extract_strided_slice %3 {offsets = [0, 0], sizes = [16, 128], strides = [1, 1]} : vector<16x512xbf16> to vector<16x128xbf16>
    %c0_3 = arith.constant 0 : index
    %c0_4 = arith.constant 0 : index
    %5 = vector.load %arg5[%c0_3, %c0_4] : memref<64x128xbf16, #tpu.memory_space<vmem>>, vector<16x128xbf16>
    tpu.vector_store %arg5[%c0_3, %c0_4], %4 {strides = array<i32>} : memref<64x128xbf16, #tpu.memory_space<vmem>>, vector<16x128xbf16>,
    %6 = vector.extract_strided_slice %3 {offsets = [0, 128], sizes = [16, 128], strides = [1, 1]} : vector<16x512xbf16> to vector<16x128xbf16>
    %c16 = arith.constant 16 : index
    %c0_5 = arith.constant 0 : index
    %7 = vector.load %arg5[%c16, %c0_5] : memref<64x128xbf16, #tpu.memory_space<vmem>>, vector<16x128xbf16>
    tpu.vector_store %arg5[%c16, %c0_5], %6 {strides = array<i32>} : memref<64x128xbf16, #tpu.memory_space<vmem>>, vector<16x128xbf16>,
    %8 = vector.extract_strided_slice %3 {offsets = [0, 256], sizes = [16, 128], strides = [1, 1]} : vector<16x512xbf16> to vector<16x128xbf16>
    %c32 = arith.constant 32 : index
    %c0_6 = arith.constant 0 : index
    %9 = vector.load %arg5[%c32, %c0_6] : memref<64x128xbf16, #tpu.memory_space<vmem>>, vector<16x128xbf16>
    tpu.vector_store %arg5[%c32, %c0_6], %8 {strides = array<i32>} : memref<64x128xbf16, #tpu.memory_space<vmem>>, vector<16x128xbf16>,
    %10 = vector.extract_strided_slice %3 {offsets = [0, 384], sizes = [16, 128], strides = [1, 1]} : vector<16x512xbf16> to vector<16x128xbf16>
    %c48 = arith.constant 48 : index
    %c0_7 = arith.constant 0 : index
    %11 = vector.load %arg5[%c48, %c0_7] : memref<64x128xbf16, #tpu.memory_space<vmem>>, vector<16x128xbf16>
    tpu.vector_store %arg5[%c48, %c0_7], %10 {strides = array<i32>} : memref<64x128xbf16, #tpu.memory_space<vmem>>, vector<16x128xbf16>,
    %c0_8 = arith.constant 0 : index
    %c0_9 = arith.constant 0 : index
    %12 = vector.load %arg3[%c0_8, %c0_9] : memref<16x64xbf16, #tpu.memory_space<vmem>>, vector<16x64xbf16>
    %c0_10 = arith.constant 0 : index
    %c0_11 = arith.constant 0 : index
    %13 = vector.load %arg5[%c0_10, %c0_11] : memref<64x128xbf16, #tpu.memory_space<vmem>>, vector<64x128xbf16>
    %cst_12 = arith.constant dense<0.000000e+00> : vector<16x128xf32>
    %14 = tpu.matmul %12, %13, %cst_12 {dimension_numbers = #tpu.dot_dimension_numbers<[1], [0], [0], [1], [0, 0, 1, 1], [], []>} : vector<16x64xbf16>, vector<64x128xbf16>, vector<16x128xf32> -> vector<16x128xf32>
    %c0_13 = arith.constant 0 : index
    %c0_14 = arith.constant 0 : index
    %15 = vector.load %arg2[%c0_13, %c0_14] : memref<1x128xf32, #tpu.memory_space<vmem>>, vector<1x128xf32>
    %16 = vector.broadcast %15 : vector<1x128xf32> to vector<16x128xf32>
    %17 = arith.addf %14, %16 : vector<16x128xf32>
    %c0_15 = arith.constant 0 : index
    %c0_16 = arith.constant 0 : index
    %18 = vector.load %arg4[%c0_15, %c0_16] : memref<16x128xf32, #tpu.memory_space<vmem>>, vector<16x128xf32>
    tpu.vector_store %arg4[%c0_15, %c0_16], %17 {strides = array<i32>} : memref<16x128xf32, #tpu.memory_space<vmem>>, vector<16x128xf32>,
    return
  }
}

</mosaic_0001>

<llo_original>
// kernel: rgcn_forward.1
$region0: #{rgcn_forward.1}
  #allocation0 [shape = 'u32[]', space=smem, size = 0x4, offset = 0x4, fixed_abs, tag = 'smem constant byte address 0x4 - core index']
  #allocation1 [shape = 'u32[144,128]{1,0:T(1,128)}', space=vmem, size = 0x12000, scoped, tag = 'internal scratch']
  #allocation2 [shape = 'bf16[64,128]{1,0:T(16,128)(2,1)}', space=vmem, size = 0x4000, scoped, tag = 'scratch operand']
  %s0 = inlined_call_operand.vmem [shape: bf16[16,32], index: 0, kind: input, shape index: {}]
  %s1 = inlined_call_operand.hbm [shape: bf16[32,512], index: 1, kind: input, shape index: {}]
  %s2 = inlined_call_operand.vmem [shape: f32[1,128], index: 2, kind: input, shape index: {}]
  %s3 = inlined_call_operand.vmem [shape: bf16[16,64], index: 3, kind: input, shape index: {}]
  %s4 = inlined_call_operand.hbm [shape: f32[16,128], index: 4, kind: output, shape index: {}]
  %s5 = sld [smem:[#allocation0]]
  $region30: #{rgcn_forward.1} parent=0
    _
  %s7 = ssub.s32 1, %s5
  %s8 = scalar_select 0, %s7, %s5
  $region1: #{rgcn_forward.1} parent=0
    #allocation3 [shape = 'u8[32768]{0}', space=vmem, size = 0x8000, scoped, tag = 'input window, operand 1, single buffered']
    #allocation4 [shape = 's32[1]{0}', space=sflag, size = 0x4, scoped, tag = 'scoped memory for rgcn_forward.1']
    #allocation5 [shape = 's32[1]{0}', space=sflag, size = 0x4, scoped, tag = 'scoped memory for rgcn_forward.1']
    #allocation6 [shape = 'u8[8192]{0}', space=vmem, size = 0x2000, scoped, tag = 'output window, operand 0, single buffered']
    %9 = vsyncpa [#allocation4], 0
    %10 = vsyncpa [#allocation5], 0
    // Predicated region
    $region2: #{rgcn_forward.1} parent=1 // pred_check
      _
    $region3: #{rgcn_forward.1} parent=1 // pred_check_branch
      %12 = sbr.rel (0) target = $region5
    $region4: #{rgcn_forward.1} parent=1 // pred_region
      _
    $region5: #{rgcn_forward.1} parent=1 // pred_fallthru
      _
    // Predicated region
    $region6: #{rgcn_forward.1} parent=1 // pred_check
      _
    $region7: #{rgcn_forward.1} parent=1 // pred_check_branch
      %14 = sbr.rel (0) target = $region9
    $region8: #{rgcn_forward.1} parent=1 // pred_region
      %s16 = ssub.s32 1024, 1024
      %17 = vsyncadd [#allocation4], %s16
      %s18 = sshll.u32 [#allocation3], 4
      %s19 = int_to_ptr.vmem [resolvable:$true] %s18
      %24 = dma.hbm_to_vmem [thread:$0]  %s1, 1024, %s19, [#allocation4], 256, 256, 16
    $region9: #{rgcn_forward.1} parent=1 // pred_fallthru
      _
    // Predicated region
    $region10: #{rgcn_forward.1} parent=1 // pred_check
      _
    $region11: #{rgcn_forward.1} parent=1 // pred_check_branch
      %26 = sbr.rel (0) target = $region13
    $region12: #{rgcn_forward.1} parent=1 // pred_region
      _
    $region13: #{rgcn_forward.1} parent=1 // pred_fallthru
      _
    // Predicated region
    $region14: #{rgcn_forward.1} parent=1 // pred_check
      _
    $region15: #{rgcn_forward.1} parent=1 // pred_check_branch
      %28 = sbr.rel (0) target = $region17
    $region16: #{rgcn_forward.1} parent=1 // pred_region
      _
    $region17: #{rgcn_forward.1} parent=1 // pred_fallthru
      _
    // Predicated region
    $region18: #{rgcn_forward.1} parent=1 // pred_check
      _
    $region19: #{rgcn_forward.1} parent=1 // pred_check_branch
      %30 = sbr.rel (0) target = $region21
    $region20: #{rgcn_forward.1} parent=1 // pred_region
      %31 = dma.done [#allocation4], 1024
    $region21: #{rgcn_forward.1} parent=1 // pred_fallthru
      _
    %v33 = vld [vmem:[%s0] sm:$0xf]
    %v34 = vld [vmem:[%s0 + $0x4] sm:$0xf]
    %v35 = vld [vmem:[#allocation3] sm:$0xff]
    %v36 = vld [vmem:[#allocation3 + $0x8] sm:$0xff]
    %v37 = vld [vmem:[#allocation3 + $0x10] sm:$0xff]
    %v38 = vld [vmem:[#allocation3 + $0x18] sm:$0xff]
    %v39 = vld [vmem:[#allocation3 + $0x20] sm:$0xff]
    %v40 = vld [vmem:[#allocation3 + $0x28] sm:$0xff]
    %v41 = vld [vmem:[#allocation3 + $0x30] sm:$0xff]
    %v42 = vld [vmem:[#allocation3 + $0x38] sm:$0xff]
    %v45 = vunpack.c.l.b16 %v33
    %v46 = vunpack.c.l.b16 %v34
    %v47 = vpack.c.b16 %v46, %v45
    %v56 = vunpack.c.l.b16 %v35
    %v57 = vunpack.c.h.b16 %v35
    %v58 = vunpack.c.l.b16 %v36
    %v59 = vunpack.c.h.b16 %v36
    %v60 = vunpack.c.l.b16 %v37
    %v61 = vunpack.c.h.b16 %v37
    %v62 = vunpack.c.l.b16 %v38
    %v63 = vunpack.c.h.b16 %v38
    %v64 = vunpack.c.l.b16 %v39
    %v65 = vunpack.c.h.b16 %v39
    %v66 = vunpack.c.l.b16 %v40
    %v67 = vunpack.c.h.b16 %v40
    %v68 = vunpack.c.l.b16 %v41
    %v69 = vunpack.c.h.b16 %v41
    %v70 = vunpack.c.l.b16 %v42
    %v71 = vunpack.c.h.b16 %v42
    %v72 = vpack.c.b16 %v60, %v56
    %v73 = vpack.c.b16 %v61, %v57
    %v74 = vpack.c.b16 %v62, %v58
    %v75 = vpack.c.b16 %v63, %v59
    %v76 = vpack.c.b16 %v68, %v64
    %v77 = vpack.c.b16 %v69, %v65
    %v78 = vpack.c.b16 %v70, %v66
    %v79 = vpack.c.b16 %v71, %v67
    %vm88 = vcmask 261120
    %v90 = vsel %vm88, %v47, 0
    %92 = vmatprep.subr.bf16.mxu0 %v73
    %93 = vmatpush1.bf16.msra.mxu0 %v72
    %94 = vmatprep.subr.bf16.mxu0 %v77
    %95 = vmatpush1.bf16.msra.mxu0 %v76
    %96 = vmatprep.subr.bf16.mxu0 0
    %97 = vmatpush1.bf16.msra.mxu0 0
    %98 = vmatprep.subr.bf16.mxu0 0
    %99 = vmatpush1.bf16.msra.mxu0 0
    %100 = vmatprep.subr.bf16.mxu0 0
    %101 = vmatpush1.bf16.msra.mxu0 0
    %102 = vmatprep.subr.bf16.mxu0 0
    %103 = vmatpush1.bf16.msra.mxu0 0
    %104 = vmatprep.subr.bf16.mxu0 0
    %105 = vmatpush1.bf16.msra.mxu0 0
    %106 = vmatprep.subr.bf16.mxu0 0
    %107 = vmatpush1.bf16.msra.mxu0 0
    %108 = vmatprep.subr.bf16.mxu0 0
    %109 = vmatpush1.bf16.msra.mxu0 0
    %110 = vmatprep.subr.bf16.mxu0 0
    %111 = vmatpush1.bf16.msra.mxu0 0
    %112 = vmatprep.subr.bf16.mxu0 0
    %113 = vmatpush1.bf16.msra.mxu0 0
    %114 = vmatprep.subr.bf16.mxu0 0
    %115 = vmatpush1.bf16.msra.mxu0 0
    %116 = vmatprep.subr.bf16.mxu0 0
    %117 = vmatpush1.bf16.msra.mxu0 0
    %118 = vmatprep.subr.bf16.mxu0 0
    %119 = vmatpush1.bf16.msra.mxu0 0
    %120 = vmatprep.subr.bf16.mxu0 0
    %121 = vmatpush1.bf16.msra.mxu0 0
    %122 = vmatprep.subr.bf16.mxu0 0
    %123 = vmatpush1.bf16.msra.mxu0 0
    %124 = vmatprep.mubr.bf16.mxu0 0
    %125 = vmatmul.mubr.bf16.gmra.mrb[0].mxu0 %v90
    %v126 = vpop.f32.mrb[0].mxu0
    %v127 = vadd.f32 0.0, %v126
    %v128 = vpop.f32.mrb[0].mxu0
    %v129 = vadd.f32 0.0, %v128
    %v130 = vpop.f32.mrb[0].mxu0
    %v131 = vadd.f32 0.0, %v130
    %v132 = vpop.f32.mrb[0].mxu0
    %v133 = vadd.f32 0.0, %v132
    %134 = vdwg.mxu0
    %135 = vmatprep.subr.bf16.mxu0 %v75
    %136 = vmatpush1.bf16.msra.mxu0 %v74
    %137 = vmatprep.subr.bf16.mxu0 %v79
    %138 = vmatpush1.bf16.msra.mxu0 %v78
    %139 = vmatprep.subr.bf16.mxu0 0
    %140 = vmatpush1.bf16.msra.mxu0 0
    %141 = vmatprep.subr.bf16.mxu0 0
    %142 = vmatpush1.bf16.msra.mxu0 0
    %143 = vmatprep.subr.bf16.mxu0 0
    %144 = vmatpush1.bf16.msra.mxu0 0
    %145 = vmatprep.subr.bf16.mxu0 0
    %146 = vmatpush1.bf16.msra.mxu0 0
    %147 = vmatprep.subr.bf16.mxu0 0
    %148 = vmatpush1.bf16.msra.mxu0 0
    %149 = vmatprep.subr.bf16.mxu0 0
    %150 = vmatpush1.bf16.msra.mxu0 0
    %151 = vmatprep.subr.bf16.mxu0 0
    %152 = vmatpush1.bf16.msra.mxu0 0
    %153 = vmatprep.subr.bf16.mxu0 0
    %154 = vmatpush1.bf16.msra.mxu0 0
    %155 = vmatprep.subr.bf16.mxu0 0
    %156 = vmatpush1.bf16.msra.mxu0 0
    %157 = vmatprep.subr.bf16.mxu0 0
    %158 = vmatpush1.bf16.msra.mxu0 0
    %159 = vmatprep.subr.bf16.mxu0 0
    %160 = vmatpush1.bf16.msra.mxu0 0
    %161 = vmatprep.subr.bf16.mxu0 0
    %162 = vmatpush1.bf16.msra.mxu0 0
    %163 = vmatprep.subr.bf16.mxu0 0
    %164 = vmatpush1.bf16.msra.mxu0 0
    %165 = vmatprep.subr.bf16.mxu0 0
    %166 = vmatpush1.bf16.msra.mxu0 0
    %167 = vmatprep.mubr.bf16.mxu0 0
    %168 = vmatmul.mubr.bf16.gmra.mrb[0].mxu0 %v90
    %v169 = vpop.f32.mrb[0].mxu0
    %v170 = vadd.f32 0.0, %v169
    %v171 = vpop.f32.mrb[0].mxu0
    %v172 = vadd.f32 0.0, %v171
    %v173 = vpop.f32.mrb[0].mxu0
    %v174 = vadd.f32 0.0, %v173
    %v175 = vpop.f32.mrb[0].mxu0
    %v176 = vadd.f32 0.0, %v175
    %177 = vdwg.mxu0
    %v178 = vpack.c.bf16 %v131, %v127
    %v179 = vpack.c.bf16 %v133, %v129
    %v180 = vpack.c.bf16 %v174, %v170
    %v181 = vpack.c.bf16 %v176, %v172
    %182 = vst [vmem:[#allocation2] sm:$0xff] %v178
    %183 = vst [vmem:[#allocation2 + $0x8] sm:$0xff] %v179
    %184 = vst [vmem:[#allocation2 + $0x10] sm:$0xff] %v180
    %185 = vst [vmem:[#allocation2 + $0x18] sm:$0xff] %v181
    %v186 = vld [vmem:[%s3] sm:$0xf]
    %v187 = vld [vmem:[%s3 + $0x4] sm:$0xf]
    %v188 = vld [vmem:[#allocation2] sm:$0xff]
    %v189 = vld [vmem:[#allocation2 + $0x8] sm:$0xff]
    %v190 = vld [vmem:[#allocation2 + $0x10] sm:$0xff]
    %v191 = vld [vmem:[#allocation2 + $0x18] sm:$0xff]
    %v192 = vld [vmem:[%s2] sm:$0x1]
    %v194 = vlaneseq
    %v195 = vshrl.u32 %v194, 7
    %v196 = vsub.s32 0, %v195
    %v197 = vrot.slane %v192, %v196
    %v201 = vunpack.c.l.b16 %v186
    %v202 = vunpack.c.l.b16 %v187
    %v203 = vpack.c.b16 %v202, %v201
    %vm204 = vcmask 523264
    %v206 = vsel %vm204, %v203, 0
    %208 = vmatprep.subr.bf16.mxu0 0
    %209 = vmatpush1.bf16.msra.mxu0 %v188
    %210 = vmatprep.subr.bf16.mxu0 0
    %211 = vmatpush1.bf16.msra.mxu0 %v189
    %212 = vmatprep.subr.bf16.mxu0 0
    %213 = vmatpush1.bf16.msra.mxu0 %v190
    %214 = vmatprep.subr.bf16.mxu0 0
    %215 = vmatpush1.bf16.msra.mxu0 %v191
    %216 = vmatprep.subr.bf16.mxu0 0
    %217 = vmatpush1.bf16.msra.mxu0 0
    %218 = vmatprep.subr.bf16.mxu0 0
    %219 = vmatpush1.bf16.msra.mxu0 0
    %220 = vmatprep.subr.bf16.mxu0 0
    %221 = vmatpush1.bf16.msra.mxu0 0
    %222 = vmatprep.subr.bf16.mxu0 0
    %223 = vmatpush1.bf16.msra.mxu0 0
    %224 = vmatprep.subr.bf16.mxu0 0
    %225 = vmatpush1.bf16.msra.mxu0 0
    %226 = vmatprep.subr.bf16.mxu0 0
    %227 = vmatpush1.bf16.msra.mxu0 0
    %228 = vmatprep.subr.bf16.mxu0 0
    %229 = vmatpush1.bf16.msra.mxu0 0
    %230 = vmatprep.subr.bf16.mxu0 0
    %231 = vmatpush1.bf16.msra.mxu0 0
    %232 = vmatprep.subr.bf16.mxu0 0
    %233 = vmatpush1.bf16.msra.mxu0 0
    %234 = vmatprep.subr.bf16.mxu0 0
    %235 = vmatpush1.bf16.msra.mxu0 0
    %236 = vmatprep.subr.bf16.mxu0 0
    %237 = vmatpush1.bf16.msra.mxu0 0
    %238 = vmatprep.subr.bf16.mxu0 0
    %239 = vmatpush1.bf16.msra.mxu0 0
    %240 = vmatprep.mubr.bf16.mxu0 0
    %241 = vmatmul.mubr.bf16.gmra.mrb[0].mxu0 %v206
    %v242 = vpop.f32.mrb[0].mxu0
    %v243 = vadd.f32 %v197, %v242
    %v244 = vpop.f32.mrb[0].mxu0
    %v245 = vpop.f32.mrb[0].mxu0
    %v246 = vadd.f32 %v197, %v245
    %v247 = vpop.f32.mrb[0].mxu0
    %248 = vdwg.mxu0
    %249 = vst [vmem:[#allocation6] sm:$0xff] %v243
    %250 = vst [vmem:[#allocation6 + $0x8] sm:$0xff] %v246
    // Predicated region
    $region22: #{rgcn_forward.1} parent=1 // pred_check
      _
    $region23: #{rgcn_forward.1} parent=1 // pred_check_branch
      %252 = sbr.rel (0) target = $region25
    $region24: #{rgcn_forward.1} parent=1 // pred_region
      %s254 = ssub.s32 256, 256
      %255 = vsyncadd [#allocation5], %s254
      %s256 = sshll.u32 [#allocation6], 4
      %s257 = int_to_ptr.vmem [resolvable:$true] %s256
      %262 = dma.vmem_to_hbm [thread:$0]  %s257, 256, %s4, [#allocation5], 128, 128, 8
    $region25: #{rgcn_forward.1} parent=1 // pred_fallthru
      _
    // Predicated region
    $region26: #{rgcn_forward.1} parent=1 // pred_check
      _
    $region27: #{rgcn_forward.1} parent=1 // pred_check_branch
      %264 = sbr.rel (0) target = $region29
    $region28: #{rgcn_forward.1} parent=1 // pred_region
      %265 = dma.done [#allocation5], 256
    $region29: #{rgcn_forward.1} parent=1 // pred_fallthru
      _
    %266 = vsyncpa [#allocation4], 1
    %267 = vsyncpa [#allocation5], 1

</llo_original>
